<compile_context>
chip_gen: v6e
topology: v6e:2x2x1
jax: 0.10.0
libtpu: 0.0.40
codegen_flags: <defaults>
</compile_context>

<pallas_src>
import math
from functools import partial

import jax
import jax.numpy as jnp
from jax.experimental import pallas as pl
from jax.experimental.pallas import tpu as pltpu


# ----------------------------------------------------------------------------
# Fused linear kernel (shared fc for cls_token / rep_token)
# ----------------------------------------------------------------------------

def _linear_kernel(x_ref, w_ref, b_ref, o_ref):
    acc = jnp.dot(x_ref[...], w_ref[...], preferred_element_type=jnp.float32)
    o_ref[...] = (acc + b_ref[...]).astype(o_ref.dtype)


def pallas_linear(x, w, b, *, block_m=256):
    """y = x @ w + b.   x: (..., K), w: (K, N), b: (N,)."""
    lead, K = x.shape[:-1], x.shape[-1]
    N = w.shape[1]
    x2 = x.reshape(-1, K)
    M = x2.shape[0]
    # Tiny M (the real cls/rep workload, M = 2*B) -> one full block, one grid
    # step.  Large M -> 256-row blocks with a cdiv grid (ragged tail masked).
    tm = M if M <= 2 * block_m else block_m
    out = pl.pallas_call(
        _linear_kernel,
        out_shape=jax.ShapeDtypeStruct((M, N), x.dtype),
        grid=(pl.cdiv(M, tm),),
        in_specs=[
            pl.BlockSpec((tm, K), lambda i: (i, 0)),
            pl.BlockSpec((K, N), lambda i: (0, 0)),
            pl.BlockSpec((1, N), lambda i: (0, 0)),
        ],
        out_specs=pl.BlockSpec((tm, N), lambda i: (i, 0)),
        compiler_params=pltpu.CompilerParams(dimension_semantics=("parallel",)),
    )(x2, w, b.reshape(1, N))
    return out.reshape(*lead, N)


# ----------------------------------------------------------------------------
# Grouped / depthwise conv kernel (groups == in_channels), exact f32 on VPU
# ----------------------------------------------------------------------------

def _grouped_conv_kernel(x_ref, w_ref, b_ref, o_ref, *, s, k, OH, OW, cpg):
    # x_ref: (s*s, OH+1, OW+1, Ct)  phase-decomposed padded NHWC input slab
    # w_ref: (k*k, cpg, 1, 1, Ct)   per-tap, per-j weight vectors (lanes = Ct)
    # b_ref: (cpg, 1, 1, Ct)
    # o_ref: (Ct, cpg*OH*OW)        NCHW output rows for this channel tile
    ct = x_ref.shape[-1]
    n = OH * OW
    accs = [jnp.zeros((OH, OW, ct), jnp.float32) for _ in range(cpg)]
    for kh in range(k):
        for kw in range(k):
            qh, dh = kh % s, kh // s
            qw, dw = kw % s, kw // s
            xs = x_ref[qh * s + qw, dh:dh + OH, dw:dw + OW, :]   # (OH, OW, Ct)
            t = kh * k + kw
            for j in range(cpg):
                accs[j] = accs[j] + xs * w_ref[t, j]             # lane-aligned bcast
    for j in range(cpg):
        a = (accs[j] + b_ref[j]).reshape(n, ct)   # single reshape per grid step
        o_ref[:, j * n:(j + 1) * n] = a.T.astype(o_ref.dtype)    # NCHW rows


def pallas_grouped_conv(x_nchw, w, b, stride):
    """nn.Conv2d(Cin, Cout, kernel_size=stride+1, padding=stride//2,
    stride=stride, groups=Cin, padding_mode='zeros').
    x: (B, Cin, H, W) NCHW;  w: (Cout, k, k) (per-group in-channels = 1);  b: (Cout,)."""
    B, Cin, H, W = x_nchw.shape
    Cout, k, _ = w.shape
    assert Cout % Cin == 0, "groups == in_channels requires Cout % Cin == 0"
    cpg = Cout // Cin
    s = stride
    p = s // 2
    OH = (H + 2 * p - k) // s + 1
    OW = (W + 2 * p - k) // s + 1
    OHB, OWB = OH + 1, OW + 1
    Hp, Wp = s * OHB, s * OWB

    # Input prep: zero-pad + space-to-depth into s*s phases (a 1x permutation,
    # NOT a k*k im2col).  Tap (kh, kw) of output (oh, ow) reads phase
    # (kh % s, kw % s) at block offset (oh + kh//s, ow + kw//s).  This is the
    # only wrapper-side copy; allow_input_fusion lets XLA fold this producer
    # into the pallas_call input DMA instead of materialising it in HBM.
    x_nhwc = jnp.transpose(x_nchw, (0, 2, 3, 1))
    xpad = jnp.pad(x_nhwc, ((0, 0), (p, Hp - H - p), (p, Wp - W - p), (0, 0)))
    xph = xpad.reshape(B, OHB, s, OWB, s, Cin)
    xph = jnp.transpose(xph, (0, 2, 4, 1, 3, 5)).reshape(B, s * s, OHB, OWB, Cin)

    # Weights / bias regrouped once: PyTorch grouped-conv ordering is
    # cout = cin * cpg + j.
    w_r = jnp.transpose(w.reshape(Cin, cpg, k * k), (2, 1, 0))
    w_r = w_r.reshape(k * k, cpg, 1, 1, Cin).astype(jnp.float32)
    b_r = jnp.transpose(b.reshape(Cin, cpg), (1, 0))
    b_r = b_r.reshape(cpg, 1, 1, Cin).astype(jnp.float32)

    # Channel tiling: bounds per-step VMEM for large Cin and gives both v7x
    # TensorCores several grid steps.  Tile must be a multiple of 128 lanes.
    if Cin <= 256 or Cin % 128 != 0:
        ct = Cin
    else:
        ct = 256 if Cin % 256 == 0 else 128
    nc = Cin // ct

    out = pl.pallas_call(
        partial(_grouped_conv_kernel, s=s, k=k, OH=OH, OW=OW, cpg=cpg),
        out_shape=jax.ShapeDtypeStruct((B, Cin, cpg * OH * OW), x_nchw.dtype),
        grid=(B, nc),
        in_specs=[
            pl.BlockSpec((None, s * s, OHB, OWB, ct),
                         lambda bb, cc: (bb, 0, 0, 0, cc)),
            pl.BlockSpec((k * k, cpg, 1, 1, ct), lambda bb, cc: (0, 0, 0, 0, cc)),
            pl.BlockSpec((cpg, 1, 1, ct), lambda bb, cc: (0, 0, 0, cc)),
        ],
        out_specs=pl.BlockSpec((None, ct, cpg * OH * OW),
                               lambda bb, cc: (bb, cc, 0)),
        compiler_params=pltpu.CompilerParams(
            dimension_semantics=("parallel", "parallel"),
            allow_input_fusion=[True, False, False],
        ),
    )(xph, w_r, b_r)
    # (B, Cin, cpg*OH*OW) is exactly (B, Cout, OH, OW) in row-major order:
    # metadata-only reshape, no output transpose / HBM round trip.
    return out.reshape(B, Cout, OH, OW)


# ----------------------------------------------------------------------------
# Module forward + parameter init + pure-JAX reference
# ----------------------------------------------------------------------------

def conv_head_pooling_forward(params, x, cls_token, rep_token, *, stride):
    y = pallas_grouped_conv(x, params['conv_w'], params['conv_b'], stride)
    # cls_token and rep_token share the same nn.Linear -> one fused matmul.
    n_cls = cls_token.shape[1]
    tokens = jnp.concatenate([cls_token, rep_token], axis=1)
    tok = pallas_linear(tokens, params['fc_w'], params['fc_b'])
    return y, tok[:, :n_cls], tok[:, n_cls:]


def init_conv_head_pooling_params(key, in_feature, out_feature, stride):
    k = stride + 1
    kw_, kb_, fw_, fb_ = jax.random.split(key, 4)
    cb = 1.0 / math.sqrt(k * k)          # conv fan_in = (Cin/groups) * k * k = k*k
    lb = 1.0 / math.sqrt(in_feature)
    return {
        'conv_w': jax.random.uniform(kw_, (out_feature, k, k), jnp.float32, -cb, cb),
        'conv_b': jax.random.uniform(kb_, (out_feature,), jnp.float32, -cb, cb),
        # stored as (in, out) = transpose of the PyTorch Linear weight
        'fc_w': jax.random.uniform(fw_, (in_feature, out_feature), jnp.float32, -lb, lb),
        'fc_b': jax.random.uniform(fb_, (out_feature,), jnp.float32, -lb, lb),
    }


def reference_forward(params, x, cls_token, rep_token, stride):
    """Pure-JAX reference matching the PyTorch module."""
    Cout, k, _ = params['conv_w'].shape
    Cin = x.shape[1]
    p = stride // 2
    rhs = jnp.transpose(params['conv_w'], (1, 2, 0))[:, :, None, :]   # (k, k, 1, Cout) HWIO
    y = jax.lax.conv_general_dilated(
        x, rhs, window_strides=(stride, stride), padding=[(p, p), (p, p)],
        dimension_numbers=('NCHW', 'HWIO', 'NCHW'), feature_group_count=Cin,
        precision=jax.lax.Precision.HIGHEST)
    y = y + params['conv_b'][None, :, None, None]
    cls_o = jnp.einsum('bnc,cd->bnd', cls_token, params['fc_w'],
                       precision=jax.lax.Precision.HIGHEST) + params['fc_b']
    rep_o = jnp.einsum('bnc,cd->bnd', rep_token, params['fc_w'],
                       precision=jax.lax.Precision.HIGHEST) + params['fc_b']
    return y, cls_o, rep_o


# ----------------------------------------------------------------------------

if __name__ == "__main__":
    def run_case(key, B, H, W, Cin, Cout, stride):
        kp, kx, kc, kr = jax.random.split(key, 4)
        params = init_conv_head_pooling_params(kp, Cin, Cout, stride)
        x = jax.random.normal(kx, (B, Cin, H, W), jnp.float32)
        cls_token = jax.random.normal(kc, (B, 1, Cin), jnp.float32)
        rep_token = jax.random.normal(kr, (B, 1, Cin), jnp.float32)

        fwd = jax.jit(partial(conv_head_pooling_forward, stride=stride))
        y, cls_o, rep_o = fwd(params, x, cls_token, rep_token)
        jax.block_until_ready(y)
        jax.block_until_ready(cls_o)
        jax.block_until_ready(rep_o)

        y_ref, cls_ref, rep_ref = reference_forward(params, x, cls_token, rep_token, stride)
        conv_err = float(jnp.max(jnp.abs(y - y_ref)))
        tok_err = max(float(jnp.max(jnp.abs(cls_o - cls_ref))),
                      float(jnp.max(jnp.abs(rep_o - rep_ref))))
        assert conv_err < 1e-4, ("conv mismatch", conv_err)  # exact f32 VPU path
        assert tok_err < 5e-2, ("fc mismatch", tok_err)      # MXU default precision
        return y, cls_o, rep_o

    root = jax.random.PRNGKey(0)
    k_case1, k_case2 = jax.random.split(root)

    # PiT pooling between stages: Cout = 2 * Cin (grouped conv, cpg = 2).
    y, c, r = run_case(k_case1, B=2, H=16, W=16, Cin=4, Cout=8, stride=2)
    assert y.shape == (2, 8, 8, 8) and c.shape == (2, 1, 8) and r.shape == (2, 1, 8)

    # Pure depthwise config (Cout == Cin, cpg = 1).
    y2, c2, r2 = run_case(k_case2, B=2, H=16, W=16, Cin=4, Cout=4, stride=2)
    assert y2.shape == (2, 4, 8, 8) and c2.shape == (2, 1, 4) and r2.shape == (2, 1, 4)

    print("KERNEL_OK")
</pallas_src>

<mosaic_0001>
module attributes {stable_mosaic.version = 11 : i64} {
  func.func @_grouped_conv_kernel(%arg0: i32, %arg1: i32, %arg2: memref<1x4x9x9x4xf32, #tpu.memory_space<vmem>>, %arg3: memref<9x2x1x1x4xf32, #tpu.memory_space<vmem>>, %arg4: memref<2x1x1x4xf32, #tpu.memory_space<vmem>>, %arg5: memref<1x4x128xf32, #tpu.memory_space<vmem>>) attributes {dimension_semantics = [#tpu.dimension_semantics<parallel>, #tpu.dimension_semantics<parallel>], iteration_bounds = array<i64: 2, 1>, scalar_prefetch = 0 : i64, scratch_operands = 0 : i64, tpu.core_type = #tpu.core_type<tc>, window_params = [{transform_indices = @transform_0, window_bounds = array<i64: 1, 4, 9, 9, 4>}, {transform_indices = @transform_1, window_bounds = array<i64: 9, 2, 1, 1, 4>}, {transform_indices = @transform_2, window_bounds = array<i64: 2, 1, 1, 4>}, {transform_indices = @transform_3, window_bounds = array<i64: 1, 4, 128>}]} {
    %cst = arith.constant 0.000000e+00 : f32
    %0 = vector.broadcast %cst : f32 to vector<8x8x4xf32>
    %cst_0 = arith.constant 0.000000e+00 : f32
    %1 = vector.broadcast %cst_0 : f32 to vector<8x8x4xf32>
    %c0 = arith.constant 0 : index
    %c0_1 = arith.constant 0 : index
    %c0_2 = arith.constant 0 : index
    %c0_3 = arith.constant 0 : index
    %c0_4 = arith.constant 0 : index
    %2 = vector.load %arg2[%c0, %c0_1, %c0_2, %c0_3, %c0_4] : memref<1x4x9x9x4xf32, #tpu.memory_space<vmem>>, vector<1x1x8x8x4xf32>
    %3 = vector.shape_cast %2 : vector<1x1x8x8x4xf32> to vector<8x8x4xf32>
    %c0_5 = arith.constant 0 : index
    %c0_6 = arith.constant 0 : index
    %c0_7 = arith.constant 0 : index
    %c0_8 = arith.constant 0 : index
    %c0_9 = arith.constant 0 : index
    %4 = vector.load %arg3[%c0_5, %c0_6, %c0_7, %c0_8, %c0_9] : memref<9x2x1x1x4xf32, #tpu.memory_space<vmem>>, vector<1x1x1x1x4xf32>
    %5 = vector.shape_cast %4 : vector<1x1x1x1x4xf32> to vector<1x1x4xf32>
    %6 = vector.broadcast %5 : vector<1x1x4xf32> to vector<8x8x4xf32>
    %7 = arith.mulf %3, %6 : vector<8x8x4xf32>
    %8 = arith.addf %0, %7 : vector<8x8x4xf32>
    %c0_10 = arith.constant 0 : index
    %c1 = arith.constant 1 : index
    %c0_11 = arith.constant 0 : index
    %c0_12 = arith.constant 0 : index
    %c0_13 = arith.constant 0 : index
    %9 = vector.load %arg3[%c0_10, %c1, %c0_11, %c0_12, %c0_13] : memref<9x2x1x1x4xf32, #tpu.memory_space<vmem>>, vector<1x1x1x1x4xf32>
    %10 = vector.shape_cast %9 : vector<1x1x1x1x4xf32> to vector<1x1x4xf32>
    %11 = vector.broadcast %10 : vector<1x1x4xf32> to vector<8x8x4xf32>
    %12 = arith.mulf %3, %11 : vector<8x8x4xf32>
    %13 = arith.addf %1, %12 : vector<8x8x4xf32>
    %c0_14 = arith.constant 0 : index
    %c1_15 = arith.constant 1 : index
    %c0_16 = arith.constant 0 : index
    %c0_17 = arith.constant 0 : index
    %c0_18 = arith.constant 0 : index
    %14 = vector.load %arg2[%c0_14, %c1_15, %c0_16, %c0_17, %c0_18] : memref<1x4x9x9x4xf32, #tpu.memory_space<vmem>>, vector<1x1x8x8x4xf32>
    %15 = vector.shape_cast %14 : vector<1x1x8x8x4xf32> to vector<8x8x4xf32>
    %c1_19 = arith.constant 1 : index
    %c0_20 = arith.constant 0 : index
    %c0_21 = arith.constant 0 : index
    %c0_22 = arith.constant 0 : index
    %c0_23 = arith.constant 0 : index
    %16 = vector.load %arg3[%c1_19, %c0_20, %c0_21, %c0_22, %c0_23] : memref<9x2x1x1x4xf32, #tpu.memory_space<vmem>>, vector<1x1x1x1x4xf32>
    %17 = vector.shape_cast %16 : vector<1x1x1x1x4xf32> to vector<1x1x4xf32>
    %18 = vector.broadcast %17 : vector<1x1x4xf32> to vector<8x8x4xf32>
    %19 = arith.mulf %15, %18 : vector<8x8x4xf32>
    %20 = arith.addf %8, %19 : vector<8x8x4xf32>
    %c1_24 = arith.constant 1 : index
    %c1_25 = arith.constant 1 : index
    %c0_26 = arith.constant 0 : index
    %c0_27 = arith.constant 0 : index
    %c0_28 = arith.constant 0 : index
    %21 = vector.load %arg3[%c1_24, %c1_25, %c0_26, %c0_27, %c0_28] : memref<9x2x1x1x4xf32, #tpu.memory_space<vmem>>, vector<1x1x1x1x4xf32>
    %22 = vector.shape_cast %21 : vector<1x1x1x1x4xf32> to vector<1x1x4xf32>
    %23 = vector.broadcast %22 : vector<1x1x4xf32> to vector<8x8x4xf32>
    %24 = arith.mulf %15, %23 : vector<8x8x4xf32>
    %25 = arith.addf %13, %24 : vector<8x8x4xf32>
    %c0_29 = arith.constant 0 : index
    %c0_30 = arith.constant 0 : index
    %c0_31 = arith.constant 0 : index
    %c1_32 = arith.constant 1 : index
    %c0_33 = arith.constant 0 : index
    %26 = vector.load %arg2[%c0_29, %c0_30, %c0_31, %c1_32, %c0_33] : memref<1x4x9x9x4xf32, #tpu.memory_space<vmem>>, vector<1x1x8x8x4xf32>
    %27 = vector.shape_cast %26 : vector<1x1x8x8x4xf32> to vector<8x8x4xf32>
    %c2 = arith.constant 2 : index
    %c0_34 = arith.constant 0 : index
    %c0_35 = arith.constant 0 : index
    %c0_36 = arith.constant 0 : index
    %c0_37 = arith.constant 0 : index
    %28 = vector.load %arg3[%c2, %c0_34, %c0_35, %c0_36, %c0_37] : memref<9x2x1x1x4xf32, #tpu.memory_space<vmem>>, vector<1x1x1x1x4xf32>
    %29 = vector.shape_cast %28 : vector<1x1x1x1x4xf32> to vector<1x1x4xf32>
    %30 = vector.broadcast %29 : vector<1x1x4xf32> to vector<8x8x4xf32>
    %31 = arith.mulf %27, %30 : vector<8x8x4xf32>
    %32 = arith.addf %20, %31 : vector<8x8x4xf32>
    %c2_38 = arith.constant 2 : index
    %c1_39 = arith.constant 1 : index
    %c0_40 = arith.constant 0 : index
    %c0_41 = arith.constant 0 : index
    %c0_42 = arith.constant 0 : index
    %33 = vector.load %arg3[%c2_38, %c1_39, %c0_40, %c0_41, %c0_42] : memref<9x2x1x1x4xf32, #tpu.memory_space<vmem>>, vector<1x1x1x1x4xf32>
    %34 = vector.shape_cast %33 : vector<1x1x1x1x4xf32> to vector<1x1x4xf32>
    %35 = vector.broadcast %34 : vector<1x1x4xf32> to vector<8x8x4xf32>
    %36 = arith.mulf %27, %35 : vector<8x8x4xf32>
    %37 = arith.addf %25, %36 : vector<8x8x4xf32>
    %c0_43 = arith.constant 0 : index
    %c2_44 = arith.constant 2 : index
    %c0_45 = arith.constant 0 : index
    %c0_46 = arith.constant 0 : index
    %c0_47 = arith.constant 0 : index
    %38 = vector.load %arg2[%c0_43, %c2_44, %c0_45, %c0_46, %c0_47] : memref<1x4x9x9x4xf32, #tpu.memory_space<vmem>>, vector<1x1x8x8x4xf32>
    %39 = vector.shape_cast %38 : vector<1x1x8x8x4xf32> to vector<8x8x4xf32>
    %c3 = arith.constant 3 : index
    %c0_48 = arith.constant 0 : index
    %c0_49 = arith.constant 0 : index
    %c0_50 = arith.constant 0 : index
    %c0_51 = arith.constant 0 : index
    %40 = vector.load %arg3[%c3, %c0_48, %c0_49, %c0_50, %c0_51] : memref<9x2x1x1x4xf32, #tpu.memory_space<vmem>>, vector<1x1x1x1x4xf32>
    %41 = vector.shape_cast %40 : vector<1x1x1x1x4xf32> to vector<1x1x4xf32>
    %42 = vector.broadcast %41 : vector<1x1x4xf32> to vector<8x8x4xf32>
    %43 = arith.mulf %39, %42 : vector<8x8x4xf32>
    %44 = arith.addf %32, %43 : vector<8x8x4xf32>
    %c3_52 = arith.constant 3 : index
    %c1_53 = arith.constant 1 : index
    %c0_54 = arith.constant 0 : index
    %c0_55 = arith.constant 0 : index
    %c0_56 = arith.constant 0 : index
    %45 = vector.load %arg3[%c3_52, %c1_53, %c0_54, %c0_55, %c0_56] : memref<9x2x1x1x4xf32, #tpu.memory_space<vmem>>, vector<1x1x1x1x4xf32>
    %46 = vector.shape_cast %45 : vector<1x1x1x1x4xf32> to vector<1x1x4xf32>
    %47 = vector.broadcast %46 : vector<1x1x4xf32> to vector<8x8x4xf32>
    %48 = arith.mulf %39, %47 : vector<8x8x4xf32>
    %49 = arith.addf %37, %48 : vector<8x8x4xf32>
    %c0_57 = arith.constant 0 : index
    %c3_58 = arith.constant 3 : index
    %c0_59 = arith.constant 0 : index
    %c0_60 = arith.constant 0 : index
    %c0_61 = arith.constant 0 : index
    %50 = vector.load %arg2[%c0_57, %c3_58, %c0_59, %c0_60, %c0_61] : memref<1x4x9x9x4xf32, #tpu.memory_space<vmem>>, vector<1x1x8x8x4xf32>
    %51 = vector.shape_cast %50 : vector<1x1x8x8x4xf32> to vector<8x8x4xf32>
    %c4 = arith.constant 4 : index
    %c0_62 = arith.constant 0 : index
    %c0_63 = arith.constant 0 : index
    %c0_64 = arith.constant 0 : index
    %c0_65 = arith.constant 0 : index
    %52 = vector.load %arg3[%c4, %c0_62, %c0_63, %c0_64, %c0_65] : memref<9x2x1x1x4xf32, #tpu.memory_space<vmem>>, vector<1x1x1x1x4xf32>
    %53 = vector.shape_cast %52 : vector<1x1x1x1x4xf32> to vector<1x1x4xf32>
    %54 = vector.broadcast %53 : vector<1x1x4xf32> to vector<8x8x4xf32>
    %55 = arith.mulf %51, %54 : vector<8x8x4xf32>
    %56 = arith.addf %44, %55 : vector<8x8x4xf32>
    %c4_66 = arith.constant 4 : index
    %c1_67 = arith.constant 1 : index
    %c0_68 = arith.constant 0 : index
    %c0_69 = arith.constant 0 : index
    %c0_70 = arith.constant 0 : index
    %57 = vector.load %arg3[%c4_66, %c1_67, %c0_68, %c0_69, %c0_70] : memref<9x2x1x1x4xf32, #tpu.memory_space<vmem>>, vector<1x1x1x1x4xf32>
    %58 = vector.shape_cast %57 : vector<1x1x1x1x4xf32> to vector<1x1x4xf32>
    %59 = vector.broadcast %58 : vector<1x1x4xf32> to vector<8x8x4xf32>
    %60 = arith.mulf %51, %59 : vector<8x8x4xf32>
    %61 = arith.addf %49, %60 : vector<8x8x4xf32>
    %c0_71 = arith.constant 0 : index
    %c2_72 = arith.constant 2 : index
    %c0_73 = arith.constant 0 : index
    %c1_74 = arith.constant 1 : index
    %c0_75 = arith.constant 0 : index
    %62 = vector.load %arg2[%c0_71, %c2_72, %c0_73, %c1_74, %c0_75] : memref<1x4x9x9x4xf32, #tpu.memory_space<vmem>>, vector<1x1x8x8x4xf32>
    %63 = vector.shape_cast %62 : vector<1x1x8x8x4xf32> to vector<8x8x4xf32>
    %c5 = arith.constant 5 : index
    %c0_76 = arith.constant 0 : index
    %c0_77 = arith.constant 0 : index
    %c0_78 = arith.constant 0 : index
    %c0_79 = arith.constant 0 : index
    %64 = vector.load %arg3[%c5, %c0_76, %c0_77, %c0_78, %c0_79] : memref<9x2x1x1x4xf32, #tpu.memory_space<vmem>>, vector<1x1x1x1x4xf32>
    %65 = vector.shape_cast %64 : vector<1x1x1x1x4xf32> to vector<1x1x4xf32>
    %66 = vector.broadcast %65 : vector<1x1x4xf32> to vector<8x8x4xf32>
    %67 = arith.mulf %63, %66 : vector<8x8x4xf32>
    %68 = arith.addf %56, %67 : vector<8x8x4xf32>
    %c5_80 = arith.constant 5 : index
    %c1_81 = arith.constant 1 : index
    %c0_82 = arith.constant 0 : index
    %c0_83 = arith.constant 0 : index
    %c0_84 = arith.constant 0 : index
    %69 = vector.load %arg3[%c5_80, %c1_81, %c0_82, %c0_83, %c0_84] : memref<9x2x1x1x4xf32, #tpu.memory_space<vmem>>, vector<1x1x1x1x4xf32>
    %70 = vector.shape_cast %69 : vector<1x1x1x1x4xf32> to vector<1x1x4xf32>
    %71 = vector.broadcast %70 : vector<1x1x4xf32> to vector<8x8x4xf32>
    %72 = arith.mulf %63, %71 : vector<8x8x4xf32>
    %73 = arith.addf %61, %72 : vector<8x8x4xf32>
    %c0_85 = arith.constant 0 : index
    %c0_86 = arith.constant 0 : index
    %c1_87 = arith.constant 1 : index
    %c0_88 = arith.constant 0 : index
    %c0_89 = arith.constant 0 : index
    %74 = vector.load %arg2[%c0_85, %c0_86, %c1_87, %c0_88, %c0_89] : memref<1x4x9x9x4xf32, #tpu.memory_space<vmem>>, vector<1x1x8x8x4xf32>
    %75 = vector.shape_cast %74 : vector<1x1x8x8x4xf32> to vector<8x8x4xf32>
    %c6 = arith.constant 6 : index
    %c0_90 = arith.constant 0 : index
    %c0_91 = arith.constant 0 : index
    %c0_92 = arith.constant 0 : index
    %c0_93 = arith.constant 0 : index
    %76 = vector.load %arg3[%c6, %c0_90, %c0_91, %c0_92, %c0_93] : memref<9x2x1x1x4xf32, #tpu.memory_space<vmem>>, vector<1x1x1x1x4xf32>
    %77 = vector.shape_cast %76 : vector<1x1x1x1x4xf32> to vector<1x1x4xf32>
    %78 = vector.broadcast %77 : vector<1x1x4xf32> to vector<8x8x4xf32>
    %79 = arith.mulf %75, %78 : vector<8x8x4xf32>
    %80 = arith.addf %68, %79 : vector<8x8x4xf32>
    %c6_94 = arith.constant 6 : index
    %c1_95 = arith.constant 1 : index
    %c0_96 = arith.constant 0 : index
    %c0_97 = arith.constant 0 : index
    %c0_98 = arith.constant 0 : index
    %81 = vector.load %arg3[%c6_94, %c1_95, %c0_96, %c0_97, %c0_98] : memref<9x2x1x1x4xf32, #tpu.memory_space<vmem>>, vector<1x1x1x1x4xf32>
    %82 = vector.shape_cast %81 : vector<1x1x1x1x4xf32> to vector<1x1x4xf32>
    %83 = vector.broadcast %82 : vector<1x1x4xf32> to vector<8x8x4xf32>
    %84 = arith.mulf %75, %83 : vector<8x8x4xf32>
    %85 = arith.addf %73, %84 : vector<8x8x4xf32>
    %c0_99 = arith.constant 0 : index
    %c1_100 = arith.constant 1 : index
    %c1_101 = arith.constant 1 : index
    %c0_102 = arith.constant 0 : index
    %c0_103 = arith.constant 0 : index
    %86 = vector.load %arg2[%c0_99, %c1_100, %c1_101, %c0_102, %c0_103] : memref<1x4x9x9x4xf32, #tpu.memory_space<vmem>>, vector<1x1x8x8x4xf32>
    %87 = vector.shape_cast %86 : vector<1x1x8x8x4xf32> to vector<8x8x4xf32>
    %c7 = arith.constant 7 : index
    %c0_104 = arith.constant 0 : index
    %c0_105 = arith.constant 0 : index
    %c0_106 = arith.constant 0 : index
    %c0_107 = arith.constant 0 : index
    %88 = vector.load %arg3[%c7, %c0_104, %c0_105, %c0_106, %c0_107] : memref<9x2x1x1x4xf32, #tpu.memory_space<vmem>>, vector<1x1x1x1x4xf32>
    %89 = vector.shape_cast %88 : vector<1x1x1x1x4xf32> to vector<1x1x4xf32>
    %90 = vector.broadcast %89 : vector<1x1x4xf32> to vector<8x8x4xf32>
    %91 = arith.mulf %87, %90 : vector<8x8x4xf32>
    %92 = arith.addf %80, %91 : vector<8x8x4xf32>
    %c7_108 = arith.constant 7 : index
    %c1_109 = arith.constant 1 : index
    %c0_110 = arith.constant 0 : index
    %c0_111 = arith.constant 0 : index
    %c0_112 = arith.constant 0 : index
    %93 = vector.load %arg3[%c7_108, %c1_109, %c0_110, %c0_111, %c0_112] : memref<9x2x1x1x4xf32, #tpu.memory_space<vmem>>, vector<1x1x1x1x4xf32>
    %94 = vector.shape_cast %93 : vector<1x1x1x1x4xf32> to vector<1x1x4xf32>
    %95 = vector.broadcast %94 : vector<1x1x4xf32> to vector<8x8x4xf32>
    %96 = arith.mulf %87, %95 : vector<8x8x4xf32>
    %97 = arith.addf %85, %96 : vector<8x8x4xf32>
    %c0_113 = arith.constant 0 : index
    %c0_114 = arith.constant 0 : index
    %c1_115 = arith.constant 1 : index
    %c1_116 = arith.constant 1 : index
    %c0_117 = arith.constant 0 : index
    %98 = vector.load %arg2[%c0_113, %c0_114, %c1_115, %c1_116, %c0_117] : memref<1x4x9x9x4xf32, #tpu.memory_space<vmem>>, vector<1x1x8x8x4xf32>
    %99 = vector.shape_cast %98 : vector<1x1x8x8x4xf32> to vector<8x8x4xf32>
    %c8 = arith.constant 8 : index
    %c0_118 = arith.constant 0 : index
    %c0_119 = arith.constant 0 : index
    %c0_120 = arith.constant 0 : index
    %c0_121 = arith.constant 0 : index
    %100 = vector.load %arg3[%c8, %c0_118, %c0_119, %c0_120, %c0_121] : memref<9x2x1x1x4xf32, #tpu.memory_space<vmem>>, vector<1x1x1x1x4xf32>
    %101 = vector.shape_cast %100 : vector<1x1x1x1x4xf32> to vector<1x1x4xf32>
    %102 = vector.broadcast %101 : vector<1x1x4xf32> to vector<8x8x4xf32>
    %103 = arith.mulf %99, %102 : vector<8x8x4xf32>
    %104 = arith.addf %92, %103 : vector<8x8x4xf32>
    %c8_122 = arith.constant 8 : index
    %c1_123 = arith.constant 1 : index
    %c0_124 = arith.constant 0 : index
    %c0_125 = arith.constant 0 : index
    %c0_126 = arith.constant 0 : index
    %105 = vector.load %arg3[%c8_122, %c1_123, %c0_124, %c0_125, %c0_126] : memref<9x2x1x1x4xf32, #tpu.memory_space<vmem>>, vector<1x1x1x1x4xf32>
    %106 = vector.shape_cast %105 : vector<1x1x1x1x4xf32> to vector<1x1x4xf32>
    %107 = vector.broadcast %106 : vector<1x1x4xf32> to vector<8x8x4xf32>
    %108 = arith.mulf %99, %107 : vector<8x8x4xf32>
    %109 = arith.addf %97, %108 : vector<8x8x4xf32>
    %c0_127 = arith.constant 0 : index
    %c0_128 = arith.constant 0 : index
    %c0_129 = arith.constant 0 : index
    %c0_130 = arith.constant 0 : index
    %110 = vector.load %arg4[%c0_127, %c0_128, %c0_129, %c0_130] : memref<2x1x1x4xf32, #tpu.memory_space<vmem>>, vector<1x1x1x4xf32>
    %111 = vector.shape_cast %110 : vector<1x1x1x4xf32> to vector<1x1x4xf32>
    %112 = vector.broadcast %111 : vector<1x1x4xf32> to vector<8x8x4xf32>
    %113 = arith.addf %104, %112 : vector<8x8x4xf32>
    %114 = vector.shape_cast %113 : vector<8x8x4xf32> to vector<64x4xf32>
    %115 = tpu.transpose %114, [1, 0] : vector<64x4xf32> -> vector<4x64xf32>
    %c0_131 = arith.constant 0 : index
    %c0_132 = arith.constant 0 : index
    %c0_133 = arith.constant 0 : index
    %116 = vector.load %arg5[%c0_131, %c0_132, %c0_133] : memref<1x4x128xf32, #tpu.memory_space<vmem>>, vector<1x4x64xf32>
    %117 = vector.shape_cast %116 : vector<1x4x64xf32> to vector<4x64xf32>
    %118 = vector.shape_cast %115 : vector<4x64xf32> to vector<1x4x64xf32>
    tpu.vector_store %arg5[%c0_131, %c0_132, %c0_133], %118 {strides = array<i32>} : memref<1x4x128xf32, #tpu.memory_space<vmem>>, vector<1x4x64xf32>,
    %c1_134 = arith.constant 1 : index
    %c0_135 = arith.constant 0 : index
    %c0_136 = arith.constant 0 : index
    %c0_137 = arith.constant 0 : index
    %119 = vector.load %arg4[%c1_134, %c0_135, %c0_136, %c0_137] : memref<2x1x1x4xf32, #tpu.memory_space<vmem>>, vector<1x1x1x4xf32>
    %120 = vector.shape_cast %119 : vector<1x1x1x4xf32> to vector<1x1x4xf32>
    %121 = vector.broadcast %120 : vector<1x1x4xf32> to vector<8x8x4xf32>
    %122 = arith.addf %109, %121 : vector<8x8x4xf32>
    %123 = vector.shape_cast %122 : vector<8x8x4xf32> to vector<64x4xf32>
    %124 = tpu.transpose %123, [1, 0] : vector<64x4xf32> -> vector<4x64xf32>
    %c0_138 = arith.constant 0 : index
    %c0_139 = arith.constant 0 : index
    %c64 = arith.constant 64 : index
    %125 = vector.load %arg5[%c0_138, %c0_139, %c64] : memref<1x4x128xf32, #tpu.memory_space<vmem>>, vector<1x4x64xf32>
    %126 = vector.shape_cast %125 : vector<1x4x64xf32> to vector<4x64xf32>
    %127 = vector.shape_cast %124 : vector<4x64xf32> to vector<1x4x64xf32>
    tpu.vector_store %arg5[%c0_138, %c0_139, %c64], %127 {strides = array<i32>} : memref<1x4x128xf32, #tpu.memory_space<vmem>>, vector<1x4x64xf32>,
    return
  }
  func.func @transform_0(%arg0: i32, %arg1: i32) -> (i32, i32, i32, i32, i32) {
    %c0_i32 = arith.constant 0 : i32
    %c0_i32_0 = arith.constant 0 : i32
    %c0_i32_1 = arith.constant 0 : i32
    %c0_i32_2 = arith.constant 0 : i32
    return %arg0, %c0_i32, %c0_i32_0, %c0_i32_1, %arg1 : i32, i32, i32, i32, i32
  }
  func.func @transform_1(%arg0: i32, %arg1: i32) -> (i32, i32, i32, i32, i32) {
    %c0_i32 = arith.constant 0 : i32
    %c0_i32_0 = arith.constant 0 : i32
    %c0_i32_1 = arith.constant 0 : i32
    %c0_i32_2 = arith.constant 0 : i32
    %c0_i32_3 = arith.constant 0 : i32
    return %c0_i32, %c0_i32_0, %c0_i32_1, %c0_i32_2, %arg1 : i32, i32, i32, i32, i32
  }
  func.func @transform_2(%arg0: i32, %arg1: i32) -> (i32, i32, i32, i32) {
    %c0_i32 = arith.constant 0 : i32
    %c0_i32_0 = arith.constant 0 : i32
    %c0_i32_1 = arith.constant 0 : i32
    %c0_i32_2 = arith.constant 0 : i32
    return %c0_i32, %c0_i32_0, %c0_i32_1, %arg1 : i32, i32, i32, i32
  }
  func.func @transform_3(%arg0: i32, %arg1: i32) -> (i32, i32, i32) {
    %c0_i32 = arith.constant 0 : i32
    %c0_i32_0 = arith.constant 0 : i32
    return %arg0, %arg1, %c0_i32 : i32, i32, i32
  }
}

module attributes {stable_mosaic.version = 11 : i64} {
  func.func @_linear_kernel(%arg0: i32, %arg1: memref<4x4xf32, #tpu.memory_space<vmem>>, %arg2: memref<4x8xf32, #tpu.memory_space<vmem>>, %arg3: memref<1x8xf32, #tpu.memory_space<vmem>>, %arg4: memref<4x8xf32, #tpu.memory_space<vmem>>) attributes {dimension_semantics = [#tpu.dimension_semantics<parallel>], iteration_bounds = array<i64: 1>, scalar_prefetch = 0 : i64, scratch_operands = 0 : i64, tpu.core_type = #tpu.core_type<tc>, window_params = [{transform_indices = @transform_0, window_bounds = array<i64: 4, 4>}, {pipeline_mode = #tpu.pipeline_mode<synchronous>, transform_indices = @transform_1, window_bounds = array<i64: 4, 8>}, {pipeline_mode = #tpu.pipeline_mode<synchronous>, transform_indices = @transform_2, window_bounds = array<i64: 1, 8>}, {transform_indices = @transform_3, window_bounds = array<i64: 4, 8>}]} {
    %c0 = arith.constant 0 : index
    %c0_0 = arith.constant 0 : index
    %0 = vector.load %arg1[%c0, %c0_0] : memref<4x4xf32, #tpu.memory_space<vmem>>, vector<4x4xf32>
    %c0_1 = arith.constant 0 : index
    %c0_2 = arith.constant 0 : index
    %1 = vector.load %arg2[%c0_1, %c0_2] : memref<4x8xf32, #tpu.memory_space<vmem>>, vector<4x8xf32>
    %cst = arith.constant dense<0.000000e+00> : vector<4x8xf32>
    %2 = tpu.matmul %0, %1, %cst {dimension_numbers = #tpu.dot_dimension_numbers<[1], [0], [0], [1], [0, 0, 1, 1], [], []>} : vector<4x4xf32>, vector<4x8xf32>, vector<4x8xf32> -> vector<4x8xf32>
    %c0_3 = arith.constant 0 : index
    %c0_4 = arith.constant 0 : index
    %3 = vector.load %arg3[%c0_3, %c0_4] : memref<1x8xf32, #tpu.memory_space<vmem>>, vector<1x8xf32>
    %4 = vector.broadcast %3 : vector<1x8xf32> to vector<4x8xf32>
    %5 = arith.addf %2, %4 : vector<4x8xf32>
    %c0_5 = arith.constant 0 : index
    %c0_6 = arith.constant 0 : index
    %6 = vector.load %arg4[%c0_5, %c0_6] : memref<4x8xf32, #tpu.memory_space<vmem>>, vector<4x8xf32>
    tpu.vector_store %arg4[%c0_5, %c0_6], %5 {strides = array<i32>} : memref<4x8xf32, #tpu.memory_space<vmem>>, vector<4x8xf32>,
    return
  }
  func.func @transform_0(%arg0: i32) -> (i32, i32) {
    %c0_i32 = arith.constant 0 : i32
    %c0_i32_0 = arith.constant 0 : i32
    return %arg0, %c0_i32 : i32, i32
  }
  func.func @transform_1(%arg0: i32) -> (i32, i32) {
    %c0_i32 = arith.constant 0 : i32
    %c0_i32_0 = arith.constant 0 : i32
    %c0_i32_1 = arith.constant 0 : i32
    return %c0_i32, %c0_i32_0 : i32, i32
  }
  func.func @transform_2(%arg0: i32) -> (i32, i32) {
    %c0_i32 = arith.constant 0 : i32
    %c0_i32_0 = arith.constant 0 : i32
    %c0_i32_1 = arith.constant 0 : i32
    return %c0_i32, %c0_i32_0 : i32, i32
  }
  func.func @transform_3(%arg0: i32) -> (i32, i32) {
    %c0_i32 = arith.constant 0 : i32
    %c0_i32_0 = arith.constant 0 : i32
    return %arg0, %c0_i32 : i32, i32
  }
}

</mosaic_0001>

<llo_original>
// kernel: conv_head_pooling_forward.3
$region0: #{conv_head_pooling_forward.3}
  #allocation0 [shape = 'u32[]', space=smem, size = 0x4, offset = 0x4, fixed_abs, tag = 'smem constant byte address 0x4 - core index']
  #allocation1 [shape = 'u32[144,128]{1,0:T(1,128)}', space=vmem, size = 0x12000, scoped, tag = 'internal scratch']
  %s0 = inlined_call_operand.vmem [shape: f32[4,4], index: 0, kind: input, shape index: {}]
  %s1 = inlined_call_operand.vmem [shape: f32[4,8], index: 1, kind: input, shape index: {}]
  %s2 = inlined_call_operand.vmem [shape: f32[1,8], index: 2, kind: input, shape index: {}]
  %s3 = inlined_call_operand.vmem [shape: f32[4,8], index: 3, kind: output, shape index: {}]
  %s4 = sld [smem:[#allocation0]]
  $region22: #{conv_head_pooling_forward.3} parent=0
    _
  %s6 = ssub.s32 1, %s4
  %s7 = scalar_select 0, %s6, %s4
  // Predicated region
  $region2: #{conv_head_pooling_forward.3} parent=0 // pred_check
    _
  $region3: #{conv_head_pooling_forward.3} parent=0 // pred_check_branch
    %9 = sbr.rel (0) target = $region5
  $region4: #{conv_head_pooling_forward.3} parent=0 // pred_region
    _
  $region5: #{conv_head_pooling_forward.3} parent=0 // pred_fallthru
    _
  // Predicated region
  $region6: #{conv_head_pooling_forward.3} parent=0 // pred_check
    _
  $region7: #{conv_head_pooling_forward.3} parent=0 // pred_check_branch
    %11 = sbr.rel (0) target = $region9
  $region8: #{conv_head_pooling_forward.3} parent=0 // pred_region
    _
  $region9: #{conv_head_pooling_forward.3} parent=0 // pred_fallthru
    _
  // Predicated region
  $region10: #{conv_head_pooling_forward.3} parent=0 // pred_check
    _
  $region11: #{conv_head_pooling_forward.3} parent=0 // pred_check_branch
    %13 = sbr.rel (0) target = $region13
  $region12: #{conv_head_pooling_forward.3} parent=0 // pred_region
    _
  $region13: #{conv_head_pooling_forward.3} parent=0 // pred_fallthru
    _
  %v14 = vld [vmem:[%s0] sm:$0xf]
  %v15 = vld [vmem:[%s1] sm:$0xf]
  %v16 = vld [vmem:[%s2] sm:$0x1]
  %v18 = vlaneseq
  %v19 = vshrl.u32 %v18, 7
  %v20 = vsub.s32 0, %v19
  %v21 = vrot.slane %v16, %v20
  %vm23 = vcmask 31744
  %v25 = vsel %vm23, %v14, 0
  %vm27 = vcmask 1043456
  %v29 = vsel %vm27, %v15, 0
  %31 = vmatprep.subr.mxu0 0.0
  %32 = vmatpush1.msra.mxu0 0.0
  %33 = vmatprep.subr.mxu0 0.0
  %34 = vmatpush1.msra.mxu0 0.0
  %35 = vmatprep.subr.mxu0 0.0
  %36 = vmatpush1.msra.mxu0 0.0
  %37 = vmatprep.subr.mxu0 0.0
  %38 = vmatpush1.msra.mxu0 0.0
  %39 = vmatprep.subr.mxu0 0.0
  %40 = vmatpush1.msra.mxu0 0.0
  %41 = vmatprep.subr.mxu0 0.0
  %42 = vmatpush1.msra.mxu0 0.0
  %43 = vmatprep.subr.mxu0 0.0
  %44 = vmatpush1.msra.mxu0 0.0
  %45 = vmatprep.subr.mxu0 0.0
  %46 = vmatpush1.msra.mxu0 0.0
  %47 = vmatprep.subr.mxu0 0.0
  %48 = vmatpush1.msra.mxu0 0.0
  %49 = vmatprep.subr.mxu0 0.0
  %50 = vmatpush1.msra.mxu0 0.0
  %51 = vmatprep.subr.mxu0 0.0
  %52 = vmatpush1.msra.mxu0 0.0
  %53 = vmatprep.subr.mxu0 0.0
  %54 = vmatpush1.msra.mxu0 0.0
  %55 = vmatprep.subr.mxu0 0.0
  %56 = vmatpush1.msra.mxu0 0.0
  %57 = vmatprep.subr.mxu0 0.0
  %58 = vmatpush1.msra.mxu0 0.0
  %59 = vmatprep.subr.mxu0 0.0
  %60 = vmatpush1.msra.mxu0 0.0
  %61 = vmatprep.subr.mxu0 0.0
  %62 = vmatpush1.msra.mxu0 %v29
  %63 = vmatprep.subr.mxu0 0.0
  %64 = vmatpush2.msra.mxu0 0.0
  %65 = vmatprep.subr.mxu0 0.0
  %66 = vmatpush2.msra.mxu0 0.0
  %67 = vmatprep.subr.mxu0 0.0
  %68 = vmatpush2.msra.mxu0 0.0
  %69 = vmatprep.subr.mxu0 0.0
  %70 = vmatpush2.msra.mxu0 0.0
  %71 = vmatprep.subr.mxu0 0.0
  %72 = vmatpush2.msra.mxu0 0.0
  %73 = vmatprep.subr.mxu0 0.0
  %74 = vmatpush2.msra.mxu0 0.0
  %75 = vmatprep.subr.mxu0 0.0
  %76 = vmatpush2.msra.mxu0 0.0
  %77 = vmatprep.subr.mxu0 0.0
  %78 = vmatpush2.msra.mxu0 0.0
  %79 = vmatprep.subr.mxu0 0.0
  %80 = vmatpush2.msra.mxu0 0.0
  %81 = vmatprep.subr.mxu0 0.0
  %82 = vmatpush2.msra.mxu0 0.0
  %83 = vmatprep.subr.mxu0 0.0
  %84 = vmatpush2.msra.mxu0 0.0
  %85 = vmatprep.subr.mxu0 0.0
  %86 = vmatpush2.msra.mxu0 0.0
  %87 = vmatprep.subr.mxu0 0.0
  %88 = vmatpush2.msra.mxu0 0.0
  %89 = vmatprep.subr.mxu0 0.0
  %90 = vmatpush2.msra.mxu0 0.0
  %91 = vmatprep.subr.mxu0 0.0
  %92 = vmatpush2.msra.mxu0 0.0
  %93 = vmatprep.subr.mxu0 0.0
  %94 = vmatpush2.msra.mxu0 0.0
  %95 = vmatprep.mubr.f32.mxu0 0.0
  %96 = vmatmul.mubr.f32.gmra.mxu0 %v25
  %v97 = vpop.f32.mrf.mxu0
  %v98 = vadd.f32 %v21, %v97
  %v99 = vpop.f32.mrf.mxu0
  %100 = vdwg.mxu0
  %vm101 = vcmask 60416
  %102 = vst.msk [vmem:[%s3] sm:$0xf] %vm101, %v98
  // Predicated region
  $region14: #{conv_head_pooling_forward.3} parent=0 // pred_check
    _
  $region15: #{conv_head_pooling_forward.3} parent=0 // pred_check_branch
    %104 = sbr.rel (0) target = $region17
  $region16: #{conv_head_pooling_forward.3} parent=0 // pred_region
    _
  $region17: #{conv_head_pooling_forward.3} parent=0 // pred_fallthru
    _
  // Predicated region
  $region18: #{conv_head_pooling_forward.3} parent=0 // pred_check
    _
  $region19: #{conv_head_pooling_forward.3} parent=0 // pred_check_branch
    %106 = sbr.rel (0) target = $region21
  $region20: #{conv_head_pooling_forward.3} parent=0 // pred_region
    _
  $region21: #{conv_head_pooling_forward.3} parent=0 // pred_fallthru
    _

// kernel: conv_head_pooling_forward.2
$region0: #{conv_head_pooling_forward.2}
  #allocation0 [shape = 'u32[]', space=smem, size = 0x4, offset = 0x4, fixed_abs, tag = 'smem constant byte address 0x4 - core index']
  #allocation1 [shape = 'u32[144,128]{1,0:T(1,128)}', space=vmem, size = 0x12000, scoped, tag = 'internal scratch']
  %s0 = inlined_call_operand.vmem [shape: f32[2,4,9,9,4], index: 0, kind: input, shape index: {}]
  %s1 = inlined_call_operand.vmem [shape: f32[9,2,1,1,4], index: 1, kind: input, shape index: {}]
  %s2 = inlined_call_operand.vmem [shape: f32[2,1,1,4], index: 2, kind: input, shape index: {}]
  %s3 = inlined_call_operand.vmem [shape: f32[2,4,128], index: 3, kind: output, shape index: {}]
  %s4 = sld [smem:[#allocation0]]
  $region45: #{conv_head_pooling_forward.2} parent=0
    _
  %s6 = ssub.s32 1, %s4
  %s7 = scalar_select 0, %s6, %s4
  loop: start=0, step=1, limit=4
  $region2: #{conv_head_pooling_forward.2} parent=0 // loop_pre_header
    _
  $region3: #{conv_head_pooling_forward.2} parent=0 // loop_header
    %s9 = sphi 0, %s13
    %p10 = scmp.ge.s32.totalorder %s9, 4
    %s16 = sphi 0, %s28
    %s17 = sphi 0, %s24
    %s18 = sphi 0, %s16
    %s19 = sphi 0, %s17
    %s20 = sphi 0, %s18
    %s21 = sphi 0, %s19
    %s33 = sphi 0, %s35
    %s36 = sphi 0, %s33
    %s37 = sphi 0, %s36
    %s53 = sphi 0, %s37
    %s59 = sphi 0, %s61
    %s62 = sphi 0, %s59
    %s63 = sphi 0, %s62
    %s79 = sphi 0, %s63
    %s85 = sphi 0, %s87
    %s88 = sphi 0, %s85
    %s89 = sphi 0, %s88
    %s105 = sphi 0, %s89
    %s113 = sphi 0, %s115
    %s116 = sphi 0, %s113
    %s117 = sphi 0, %s116
    %s133 = sphi 0, %s117
  $region4: #{conv_head_pooling_forward.2} parent=0 // loop_header_branch
    %12 = sbr.rel (%p10) target = $region8
  $region5: #{conv_head_pooling_forward.2} parent=0 // loop_body
    %s14 = ssub.s32 %s9, 1
    %s15 = ssub.s32 %s9, 2
    %s22 = sadd.s32 1, %s17
    %p23 = scmp.ge.s32.totalorder %s22, 1
    %s24 = scalar_select %p23, 0, %s22
    %s25 = sadd.s32 1, %s16
    %s26 = scalar_select %p23, %s25, %s16
    %p27 = scmp.ge.s32.totalorder %s26, 2
    %s28 = scalar_select %p27, 0, %s26
    %s29 = ssub.s32 %s16, %s28
    %s30 = ssub.s32 %s17, %s24
    %s31 = sor.u32 %s29, %s30
    %p32 = scmp.eq.s32.totalorder %s31, 0
    %s34 = sadd.s32 %s33, 1
    %s35 = scalar_select %p32, %s33, %s34
    %p38 = pneg %p32
    %p39 = scmp.eq.s32.totalorder %s9, 1
    %p40 = por %p38, %p39
    %p41 = scmp.ne.s32.totalorder %s33, %s36
    %p42 = scmp.eq.s32.totalorder %s9, 0
    %p43 = por %p41, %p42
    %p44 = scmp.ne.s32.totalorder %s33, %s36
    %p45 = scmp.eq.s32.totalorder %s14, 1
    %p46 = por %p44, %p45
    %p47 = scmp.ne.s32.totalorder %s36, %s37
    %p48 = scmp.eq.s32.totalorder %s14, 0
    %p49 = por %p47, %p48
    %p50 = scmp.ne.s32.totalorder %s36, %s37
    %p51 = scmp.eq.s32.totalorder %s15, 1
    %p52 = por %p50, %p51
    %p54 = scmp.ne.s32.totalorder %s37, %s53
    %p55 = scmp.eq.s32.totalorder %s15, 0
    %p56 = por %p54, %p55
    %s57 = ssub.s32 %s17, %s24
    %p58 = scmp.eq.s32.totalorder %s57, 0
    %s60 = sadd.s32 %s59, 1
    %s61 = scalar_select %p58, %s59, %s60
    %p64 = pneg %p58
    %p65 = scmp.eq.s32.totalorder %s9, 1
    %p66 = por %p64, %p65
    %p67 = scmp.ne.s32.totalorder %s59, %s62
    %p68 = scmp.eq.s32.totalorder %s9, 0
    %p69 = por %p67, %p68
    %p70 = scmp.ne.s32.totalorder %s59, %s62
    %p71 = scmp.eq.s32.totalorder %s14, 1
    %p72 = por %p70, %p71
    %p73 = scmp.ne.s32.totalorder %s62, %s63
    %p74 = scmp.eq.s32.totalorder %s14, 0
    %p75 = por %p73, %p74
    %p76 = scmp.ne.s32.totalorder %s62, %s63
    %p77 = scmp.eq.s32.totalorder %s15, 1
    %p78 = por %p76, %p77
    %p80 = scmp.ne.s32.totalorder %s63, %s79
    %p81 = scmp.eq.s32.totalorder %s15, 0
    %p82 = por %p80, %p81
    %s83 = ssub.s32 %s17, %s24
    %p84 = scmp.eq.s32.totalorder %s83, 0
    %s86 = sadd.s32 %s85, 1
    %s87 = scalar_select %p84, %s85, %s86
    %p90 = pneg %p84
    %p91 = scmp.eq.s32.totalorder %s9, 1
    %p92 = por %p90, %p91
    %p93 = scmp.ne.s32.totalorder %s85, %s88
    %p94 = scmp.eq.s32.totalorder %s9, 0
    %p95 = por %p93, %p94
    %p96 = scmp.ne.s32.totalorder %s85, %s88
    %p97 = scmp.eq.s32.totalorder %s14, 1
    %p98 = por %p96, %p97
    %p99 = scmp.ne.s32.totalorder %s88, %s89
    %p100 = scmp.eq.s32.totalorder %s14, 0
    %p101 = por %p99, %p100
    %p102 = scmp.ne.s32.totalorder %s88, %s89
    %p103 = scmp.eq.s32.totalorder %s15, 1
    %p104 = por %p102, %p103
    %p106 = scmp.ne.s32.totalorder %s89, %s105
    %p107 = scmp.eq.s32.totalorder %s15, 0
    %p108 = por %p106, %p107
    %s109 = ssub.s32 %s16, %s28
    %s110 = ssub.s32 %s17, %s24
    %s111 = sor.u32 %s109, %s110
    %p112 = scmp.eq.s32.totalorder %s111, 0
    %s114 = sadd.s32 %s113, 1
    %s115 = scalar_select %p112, %s113, %s114
    %p118 = pneg %p112
    %p119 = scmp.eq.s32.totalorder %s9, 1
    %p120 = por %p118, %p119
    %p121 = scmp.ne.s32.totalorder %s113, %s116
    %p122 = scmp.eq.s32.totalorder %s9, 0
    %p123 = por %p121, %p122
    %p124 = scmp.ne.s32.totalorder %s113, %s116
    %p125 = scmp.eq.s32.totalorder %s14, 1
    %p126 = por %p124, %p125
    %p127 = scmp.ne.s32.totalorder %s116, %s117
    %p128 = scmp.eq.s32.totalorder %s14, 0
    %p129 = por %p127, %p128
    %p130 = scmp.ne.s32.totalorder %s116, %s117
    %p131 = scmp.eq.s32.totalorder %s15, 1
    %p132 = por %p130, %p131
    %p134 = scmp.ne.s32.totalorder %s117, %s133
    %p135 = scmp.eq.s32.totalorder %s15, 0
    %p136 = por %p134, %p135
    %p137 = scmp.le.s32.totalorder 1, %s9
    %p138 = scmp.lt.s32.totalorder %s9, 3
    %p139 = pnand %p137, %p138
    %p140 = pneg %p139
    // Predicated region
    $region9: #{conv_head_pooling_forward.2} parent=5 // pred_check
      _
    $region10: #{conv_head_pooling_forward.2} parent=5 // pred_check_branch
      %142 = sbr.rel (%p139) target = $region12
    $region11: #{conv_head_pooling_forward.2} parent=5 // pred_region
      %s143 = ssub.s32 %s9, 1
      // Predicated region
      $region13: #{conv_head_pooling_forward.2} parent=11 // pred_check
        %p144 = pneg %p75
      $region14: #{conv_head_pooling_forward.2} parent=11 // pred_check_branch
        %146 = sbr.rel (%p144) target = $region16
      $region15: #{conv_head_pooling_forward.2} parent=11 // pred_region
        %p147 = scmp.lt.s32.totalorder %s19, 0
        %s148 = scalar_select %p147, %s19, 0
        %s149 = scalar_lea.vmem %s1, %s148
      $region16: #{conv_head_pooling_forward.2} parent=11 // pred_fallthru
        _
      // Predicated region
      $region17: #{conv_head_pooling_forward.2} parent=11 // pred_check
        %p150 = pneg %p101
      $region18: #{conv_head_pooling_forward.2} parent=11 // pred_check_branch
        %152 = sbr.rel (%p150) target = $region20
      $region19: #{conv_head_pooling_forward.2} parent=11 // pred_region
        %p153 = scmp.lt.s32.totalorder %s19, 0
        %s154 = scalar_select %p153, %s19, 0
        %s155 = scalar_lea.vmem %s2, %s154
      $region20: #{conv_head_pooling_forward.2} parent=11 // pred_fallthru
        _
    $region12: #{conv_head_pooling_forward.2} parent=5 // pred_fallthru
      _
    %p156 = scmp.lt.s32.totalorder %s9, 2
    // Predicated region
    $region21: #{conv_head_pooling_forward.2} parent=5 // pred_check
      %p157 = pneg %p156
    $region22: #{conv_head_pooling_forward.2} parent=5 // pred_check_branch
      %159 = sbr.rel (%p157) target = $region24
    $region23: #{conv_head_pooling_forward.2} parent=5 // pred_region
      // Predicated region
      $region25: #{conv_head_pooling_forward.2} parent=23 // pred_check
        %p160 = pneg %p43
      $region26: #{conv_head_pooling_forward.2} parent=23 // pred_check_branch
        %162 = sbr.rel (%p160) target = $region28
      $region27: #{conv_head_pooling_forward.2} parent=23 // pred_region
        %p163 = scmp.lt.s32.totalorder %s16, 1
        %s164 = scalar_select %p163, %s16, 1
        %p165 = scmp.lt.s32.totalorder %s17, 0
        %s166 = scalar_select %p165, %s17, 0
        %s167 = smul.addr %s164, 72
        %s168 = sadd.s32 %s166, %s167
        %s169 = smul.addr %s168, 8
        %s170 = scalar_lea.vmem %s0, %s169
      $region28: #{conv_head_pooling_forward.2} parent=23 // pred_fallthru
        _
    $region24: #{conv_head_pooling_forward.2} parent=5 // pred_fallthru
      _
    %p171 = scmp.le.s32.totalorder 1, %s9
    %p172 = scmp.lt.s32.totalorder %s9, 3
    %p173 = pnand %p171, %p172
    %p174 = pneg %p173
    // Predicated region
    $region29: #{conv_head_pooling_forward.2} parent=5 // pred_check
      _
    $region30: #{conv_head_pooling_forward.2} parent=5 // pred_check_branch
      %176 = sbr.rel (%p173) target = $region32
    $region31: #{conv_head_pooling_forward.2} parent=5 // pred_region
      %s177 = ssub.s32 %s9, 1
      %p178 = scmp.lt.s32.totalorder %s18, 1
      %s179 = scalar_select %p178, %s18, 1
      %p180 = scmp.lt.s32.totalorder %s19, 0
      %s181 = scalar_select %p180, %s19, 0
      %s182 = smul.addr %s179, 72
      %s183 = sadd.s32 %s181, %s182
      %s184 = smul.addr %s183, 8
      %s185 = scalar_lea.vmem %s0, %s184
      %p186 = pneg %p49
      %p187 = pneg %p46
      %p188 = scmp.lt.s32.totalorder %s19, 0
      %s189 = scalar_select %p188, %s19, 0
      %s190 = scalar_lea.vmem %s1, %s189
      %p191 = pneg %p75
      %p192 = pneg %p72
      %p193 = scmp.lt.s32.totalorder %s19, 0
      %s194 = scalar_select %p193, %s19, 0
      %s195 = scalar_lea.vmem %s2, %s194
      %p196 = pneg %p101
      %p197 = pneg %p98
      %p198 = pneg %p129
      %p199 = pneg %p126
      %p200 = scmp.lt.s32.totalorder %s18, 1
      %s201 = scalar_select %p200, %s18, 1
      %p202 = scmp.lt.s32.totalorder %s19, 0
      %s203 = scalar_select %p202, %s19, 0
      %s204 = sadd.s32 %s203, %s201
      %s205 = smul.addr %s204, 4
      %s206 = scalar_lea.vmem %s3, %s205
      %p207 = scmp.lt.s32.totalorder %s18, 1
      %s208 = scalar_select %p207, %s18, 1
      %p209 = scmp.lt.s32.totalorder %s19, 0
      %s210 = scalar_select %p209, %s19, 0
      %s211 = smul.addr %s208, 72
      %s212 = sadd.s32 %s210, %s211
      %s213 = smul.addr %s212, 8
      %s214 = scalar_lea.vmem %s0, %s213
      %p215 = scmp.lt.s32.totalorder %s19, 0
      %s216 = scalar_select %p215, %s19, 0
      %s217 = scalar_lea.vmem %s1, %s216
      %p218 = scmp.lt.s32.totalorder %s19, 0
      %s219 = scalar_select %p218, %s19, 0
      %s220 = scalar_lea.vmem %s2, %s219
      %p221 = scmp.lt.s32.totalorder %s18, 1
      %s222 = scalar_select %p221, %s18, 1
      %p223 = scmp.lt.s32.totalorder %s19, 0
      %s224 = scalar_select %p223, %s19, 0
      %s225 = sadd.s32 %s224, %s222
      %s226 = smul.addr %s225, 4
      %s227 = scalar_lea.vmem %s3, %s226
      %v228 = vld [vmem:[%s214] sm:$0xff]
      %v229 = vld [vmem:[%s214 + $0x10] sm:$0xff]
      %v230 = vld [vmem:[%s214 + $0x20] sm:$0xff]
      %v231 = vld [vmem:[%s214 + $0x30] sm:$0xff]
      %v232 = vld [vmem:[%s214 + $0x40] sm:$0xff]
      %v233 = vld [vmem:[%s214 + $0x50] sm:$0xff]
      %v234 = vld [vmem:[%s214 + $0x60] sm:$0xff]
      %v235 = vld [vmem:[%s214 + $0x70] sm:$0xff]
      %v236 = vld [vmem:[%s217] sm:$0x1]
      %v238 = vlaneseq
      %v239 = vshrl.u32 %v238, 7
      %v240 = vsub.s32 0, %v239
      %v241 = vrot.slane %v236, %v240
      %v243 = vmul.f32 %v228, %v241
      %v244 = vmul.f32 %v229, %v241
      %v245 = vmul.f32 %v230, %v241
      %v246 = vmul.f32 %v231, %v241
      %v247 = vmul.f32 %v232, %v241
      %v248 = vmul.f32 %v233, %v241
      %v249 = vmul.f32 %v234, %v241
      %v250 = vmul.f32 %v235, %v241
      %v251 = vadd.f32 %v243, 0.0
      %v252 = vadd.f32 %v244, 0.0
      %v253 = vadd.f32 %v245, 0.0
      %v254 = vadd.f32 %v246, 0.0
      %v255 = vadd.f32 %v247, 0.0
      %v256 = vadd.f32 %v248, 0.0
      %v257 = vadd.f32 %v249, 0.0
      %v258 = vadd.f32 %v250, 0.0
      %s259 = scalar_lea.vmem %s217, 1
      %v260 = vld [vmem:[%s259] sm:$0x1]
      %v262 = vlaneseq
      %v263 = vshrl.u32 %v262, 7
      %v264 = vsub.s32 0, %v263
      %v265 = vrot.slane %v260, %v264
      %v267 = vmul.f32 %v228, %v265
      %v268 = vmul.f32 %v229, %v265
      %v269 = vmul.f32 %v230, %v265
      %v270 = vmul.f32 %v231, %v265
      %v271 = vmul.f32 %v232, %v265
      %v272 = vmul.f32 %v233, %v265
      %v273 = vmul.f32 %v234, %v265
      %v274 = vmul.f32 %v235, %v265
      %v275 = vadd.f32 %v267, 0.0
      %v276 = vadd.f32 %v268, 0.0
      %v277 = vadd.f32 %v269, 0.0
      %v278 = vadd.f32 %v270, 0.0
      %v279 = vadd.f32 %v271, 0.0
      %v280 = vadd.f32 %v272, 0.0
      %v281 = vadd.f32 %v273, 0.0
      %v282 = vadd.f32 %v274, 0.0
      %s283 = scalar_lea.vmem %s214, 144
      %v284 = vld [vmem:[%s283] sm:$0xff]
      %v285 = vld [vmem:[%s283 + $0x10] sm:$0xff]
      %v286 = vld [vmem:[%s283 + $0x20] sm:$0xff]
      %v287 = vld [vmem:[%s283 + $0x30] sm:$0xff]
      %v288 = vld [vmem:[%s283 + $0x40] sm:$0xff]
      %v289 = vld [vmem:[%s283 + $0x50] sm:$0xff]
      %v290 = vld [vmem:[%s283 + $0x60] sm:$0xff]
      %v291 = vld [vmem:[%s283 + $0x70] sm:$0xff]
      %s292 = scalar_lea.vmem %s217, 2
      %v293 = vld [vmem:[%s292] sm:$0x1]
      %v295 = vlaneseq
      %v296 = vshrl.u32 %v295, 7
      %v297 = vsub.s32 0, %v296
      %v298 = vrot.slane %v293, %v297
      %v300 = vmul.f32 %v284, %v298
      %v301 = vmul.f32 %v285, %v298
      %v302 = vmul.f32 %v286, %v298
      %v303 = vmul.f32 %v287, %v298
      %v304 = vmul.f32 %v288, %v298
      %v305 = vmul.f32 %v289, %v298
      %v306 = vmul.f32 %v290, %v298
      %v307 = vmul.f32 %v291, %v298
      %v308 = vadd.f32 %v251, %v300
      %v309 = vadd.f32 %v252, %v301
      %v310 = vadd.f32 %v253, %v302
      %v311 = vadd.f32 %v254, %v303
      %v312 = vadd.f32 %v255, %v304
      %v313 = vadd.f32 %v256, %v305
      %v314 = vadd.f32 %v257, %v306
      %v315 = vadd.f32 %v258, %v307
      %s316 = scalar_lea.vmem %s217, 3
      %v317 = vld [vmem:[%s316] sm:$0x1]
      %v319 = vlaneseq
      %v320 = vshrl.u32 %v319, 7
      %v321 = vsub.s32 0, %v320
      %v322 = vrot.slane %v317, %v321
      %v324 = vmul.f32 %v284, %v322
      %v325 = vmul.f32 %v285, %v322
      %v326 = vmul.f32 %v286, %v322
      %v327 = vmul.f32 %v287, %v322
      %v328 = vmul.f32 %v288, %v322
      %v329 = vmul.f32 %v289, %v322
      %v330 = vmul.f32 %v290, %v322
      %v331 = vmul.f32 %v291, %v322
      %v332 = vadd.f32 %v275, %v324
      %v333 = vadd.f32 %v276, %v325
      %v334 = vadd.f32 %v277, %v326
      %v335 = vadd.f32 %v278, %v327
      %v336 = vadd.f32 %v279, %v328
      %v337 = vadd.f32 %v280, %v329
      %v338 = vadd.f32 %v281, %v330
      %v339 = vadd.f32 %v282, %v331
      %v340 = vld [vmem:[%s214 + $0x1] sm:$0xff]
      %v341 = vld [vmem:[%s214 + $0x11] sm:$0xff]
      %v342 = vld [vmem:[%s214 + $0x21] sm:$0xff]
      %v343 = vld [vmem:[%s214 + $0x31] sm:$0xff]
      %v344 = vld [vmem:[%s214 + $0x41] sm:$0xff]
      %v345 = vld [vmem:[%s214 + $0x51] sm:$0xff]
      %v346 = vld [vmem:[%s214 + $0x61] sm:$0xff]
      %v347 = vld [vmem:[%s214 + $0x71] sm:$0xff]
      %s348 = scalar_lea.vmem %s217, 4
      %v349 = vld [vmem:[%s348] sm:$0x1]
      %v351 = vlaneseq
      %v352 = vshrl.u32 %v351, 7
      %v353 = vsub.s32 0, %v352
      %v354 = vrot.slane %v349, %v353
      %v356 = vmul.f32 %v340, %v354
      %v357 = vmul.f32 %v341, %v354
      %v358 = vmul.f32 %v342, %v354
      %v359 = vmul.f32 %v343, %v354
      %v360 = vmul.f32 %v344, %v354
      %v361 = vmul.f32 %v345, %v354
      %v362 = vmul.f32 %v346, %v354
      %v363 = vmul.f32 %v347, %v354
      %v364 = vadd.f32 %v308, %v356
      %v365 = vadd.f32 %v309, %v357
      %v366 = vadd.f32 %v310, %v358
      %v367 = vadd.f32 %v311, %v359
      %v368 = vadd.f32 %v312, %v360
      %v369 = vadd.f32 %v313, %v361
      %v370 = vadd.f32 %v314, %v362
      %v371 = vadd.f32 %v315, %v363
      %s372 = scalar_lea.vmem %s217, 5
      %v373 = vld [vmem:[%s372] sm:$0x1]
      %v375 = vlaneseq
      %v376 = vshrl.u32 %v375, 7
      %v377 = vsub.s32 0, %v376
      %v378 = vrot.slane %v373, %v377
      %v380 = vmul.f32 %v340, %v378
      %v381 = vmul.f32 %v341, %v378
      %v382 = vmul.f32 %v342, %v378
      %v383 = vmul.f32 %v343, %v378
      %v384 = vmul.f32 %v344, %v378
      %v385 = vmul.f32 %v345, %v378
      %v386 = vmul.f32 %v346, %v378
      %v387 = vmul.f32 %v347, %v378
      %v388 = vadd.f32 %v332, %v380
      %v389 = vadd.f32 %v333, %v381
      %v390 = vadd.f32 %v334, %v382
      %v391 = vadd.f32 %v335, %v383
      %v392 = vadd.f32 %v336, %v384
      %v393 = vadd.f32 %v337, %v385
      %v394 = vadd.f32 %v338, %v386
      %v395 = vadd.f32 %v339, %v387
      %s396 = scalar_lea.vmem %s214, 288
      %v397 = vld [vmem:[%s396] sm:$0xff]
      %v398 = vld [vmem:[%s396 + $0x10] sm:$0xff]
      %v399 = vld [vmem:[%s396 + $0x20] sm:$0xff]
      %v400 = vld [vmem:[%s396 + $0x30] sm:$0xff]
      %v401 = vld [vmem:[%s396 + $0x40] sm:$0xff]
      %v402 = vld [vmem:[%s396 + $0x50] sm:$0xff]
      %v403 = vld [vmem:[%s396 + $0x60] sm:$0xff]
      %v404 = vld [vmem:[%s396 + $0x70] sm:$0xff]
      %s405 = scalar_lea.vmem %s217, 6
      %v406 = vld [vmem:[%s405] sm:$0x1]
      %v408 = vlaneseq
      %v409 = vshrl.u32 %v408, 7
      %v410 = vsub.s32 0, %v409
      %v411 = vrot.slane %v406, %v410
      %v413 = vmul.f32 %v397, %v411
      %v414 = vmul.f32 %v398, %v411
      %v415 = vmul.f32 %v399, %v411
      %v416 = vmul.f32 %v400, %v411
      %v417 = vmul.f32 %v401, %v411
      %v418 = vmul.f32 %v402, %v411
      %v419 = vmul.f32 %v403, %v411
      %v420 = vmul.f32 %v404, %v411
      %v421 = vadd.f32 %v364, %v413
      %v422 = vadd.f32 %v365, %v414
      %v423 = vadd.f32 %v366, %v415
      %v424 = vadd.f32 %v367, %v416
      %v425 = vadd.f32 %v368, %v417
      %v426 = vadd.f32 %v369, %v418
      %v427 = vadd.f32 %v370, %v419
      %v428 = vadd.f32 %v371, %v420
      %s429 = scalar_lea.vmem %s217, 7
      %v430 = vld [vmem:[%s429] sm:$0x1]
      %v432 = vlaneseq
      %v433 = vshrl.u32 %v432, 7
      %v434 = vsub.s32 0, %v433
      %v435 = vrot.slane %v430, %v434
      %v437 = vmul.f32 %v397, %v435
      %v438 = vmul.f32 %v398, %v435
      %v439 = vmul.f32 %v399, %v435
      %v440 = vmul.f32 %v400, %v435
      %v441 = vmul.f32 %v401, %v435
      %v442 = vmul.f32 %v402, %v435
      %v443 = vmul.f32 %v403, %v435
      %v444 = vmul.f32 %v404, %v435
      %v445 = vadd.f32 %v388, %v437
      %v446 = vadd.f32 %v389, %v438
      %v447 = vadd.f32 %v390, %v439
      %v448 = vadd.f32 %v391, %v440
      %v449 = vadd.f32 %v392, %v441
      %v450 = vadd.f32 %v393, %v442
      %v451 = vadd.f32 %v394, %v443
      %v452 = vadd.f32 %v395, %v444
      %s453 = scalar_lea.vmem %s214, 432
      %v454 = vld [vmem:[%s453] sm:$0xff]
      %v455 = vld [vmem:[%s453 + $0x10] sm:$0xff]
      %v456 = vld [vmem:[%s453 + $0x20] sm:$0xff]
      %v457 = vld [vmem:[%s453 + $0x30] sm:$0xff]
      %v458 = vld [vmem:[%s453 + $0x40] sm:$0xff]
      %v459 = vld [vmem:[%s453 + $0x50] sm:$0xff]
      %v460 = vld [vmem:[%s453 + $0x60] sm:$0xff]
      %v461 = vld [vmem:[%s453 + $0x70] sm:$0xff]
      %s462 = scalar_lea.vmem %s217, 8
      %v463 = vld [vmem:[%s462] sm:$0x1]
      %v465 = vlaneseq
      %v466 = vshrl.u32 %v465, 7
      %v467 = vsub.s32 0, %v466
      %v468 = vrot.slane %v463, %v467
      %v470 = vmul.f32 %v454, %v468
      %v471 = vmul.f32 %v455, %v468
      %v472 = vmul.f32 %v456, %v468
      %v473 = vmul.f32 %v457, %v468
      %v474 = vmul.f32 %v458, %v468
      %v475 = vmul.f32 %v459, %v468
      %v476 = vmul.f32 %v460, %v468
      %v477 = vmul.f32 %v461, %v468
      %v478 = vadd.f32 %v421, %v470
      %v479 = vadd.f32 %v422, %v471
      %v480 = vadd.f32 %v423, %v472
      %v481 = vadd.f32 %v424, %v473
      %v482 = vadd.f32 %v425, %v474
      %v483 = vadd.f32 %v426, %v475
      %v484 = vadd.f32 %v427, %v476
      %v485 = vadd.f32 %v428, %v477
      %s486 = scalar_lea.vmem %s217, 9
      %v487 = vld [vmem:[%s486] sm:$0x1]
      %v489 = vlaneseq
      %v490 = vshrl.u32 %v489, 7
      %v491 = vsub.s32 0, %v490
      %v492 = vrot.slane %v487, %v491
      %v494 = vmul.f32 %v454, %v492
      %v495 = vmul.f32 %v455, %v492
      %v496 = vmul.f32 %v456, %v492
      %v497 = vmul.f32 %v457, %v492
      %v498 = vmul.f32 %v458, %v492
      %v499 = vmul.f32 %v459, %v492
      %v500 = vmul.f32 %v460, %v492
      %v501 = vmul.f32 %v461, %v492
      %v502 = vadd.f32 %v445, %v494
      %v503 = vadd.f32 %v446, %v495
      %v504 = vadd.f32 %v447, %v496
      %v505 = vadd.f32 %v448, %v497
      %v506 = vadd.f32 %v449, %v498
      %v507 = vadd.f32 %v450, %v499
      %v508 = vadd.f32 %v451, %v500
      %v509 = vadd.f32 %v452, %v501
      %v510 = vld [vmem:[%s396 + $0x1] sm:$0xff]
      %v511 = vld [vmem:[%s396 + $0x11] sm:$0xff]
      %v512 = vld [vmem:[%s396 + $0x21] sm:$0xff]
      %v513 = vld [vmem:[%s396 + $0x31] sm:$0xff]
      %v514 = vld [vmem:[%s396 + $0x41] sm:$0xff]
      %v515 = vld [vmem:[%s396 + $0x51] sm:$0xff]
      %v516 = vld [vmem:[%s396 + $0x61] sm:$0xff]
      %v517 = vld [vmem:[%s396 + $0x71] sm:$0xff]
      %s518 = scalar_lea.vmem %s217, 10
      %v519 = vld [vmem:[%s518] sm:$0x1]
      %v521 = vlaneseq
      %v522 = vshrl.u32 %v521, 7
      %v523 = vsub.s32 0, %v522
      %v524 = vrot.slane %v519, %v523
      %v526 = vmul.f32 %v510, %v524
      %v527 = vmul.f32 %v511, %v524
      %v528 = vmul.f32 %v512, %v524
      %v529 = vmul.f32 %v513, %v524
      %v530 = vmul.f32 %v514, %v524
      %v531 = vmul.f32 %v515, %v524
      %v532 = vmul.f32 %v516, %v524
      %v533 = vmul.f32 %v517, %v524
      %v534 = vadd.f32 %v478, %v526
      %v535 = vadd.f32 %v479, %v527
      %v536 = vadd.f32 %v480, %v528
      %v537 = vadd.f32 %v481, %v529
      %v538 = vadd.f32 %v482, %v530
      %v539 = vadd.f32 %v483, %v531
      %v540 = vadd.f32 %v484, %v532
      %v541 = vadd.f32 %v485, %v533
      %s542 = scalar_lea.vmem %s217, 11
      %v543 = vld [vmem:[%s542] sm:$0x1]
      %v545 = vlaneseq
      %v546 = vshrl.u32 %v545, 7
      %v547 = vsub.s32 0, %v546
      %v548 = vrot.slane %v543, %v547
      %v550 = vmul.f32 %v510, %v548
      %v551 = vmul.f32 %v511, %v548
      %v552 = vmul.f32 %v512, %v548
      %v553 = vmul.f32 %v513, %v548
      %v554 = vmul.f32 %v514, %v548
      %v555 = vmul.f32 %v515, %v548
      %v556 = vmul.f32 %v516, %v548
      %v557 = vmul.f32 %v517, %v548
      %v558 = vadd.f32 %v502, %v550
      %v559 = vadd.f32 %v503, %v551
      %v560 = vadd.f32 %v504, %v552
      %v561 = vadd.f32 %v505, %v553
      %v562 = vadd.f32 %v506, %v554
      %v563 = vadd.f32 %v507, %v555
      %v564 = vadd.f32 %v508, %v556
      %v565 = vadd.f32 %v509, %v557
      %s566 = scalar_lea.vmem %s214, 16
      %v567 = vld [vmem:[%s566] sm:$0xff]
      %v568 = vld [vmem:[%s566 + $0x10] sm:$0xff]
      %v569 = vld [vmem:[%s566 + $0x20] sm:$0xff]
      %v570 = vld [vmem:[%s566 + $0x30] sm:$0xff]
      %v571 = vld [vmem:[%s566 + $0x40] sm:$0xff]
      %v572 = vld [vmem:[%s566 + $0x50] sm:$0xff]
      %v573 = vld [vmem:[%s566 + $0x60] sm:$0xff]
      %v574 = vld [vmem:[%s566 + $0x70] sm:$0xff]
      %s575 = scalar_lea.vmem %s217, 12
      %v576 = vld [vmem:[%s575] sm:$0x1]
      %v578 = vlaneseq
      %v579 = vshrl.u32 %v578, 7
      %v580 = vsub.s32 0, %v579
      %v581 = vrot.slane %v576, %v580
      %v583 = vmul.f32 %v567, %v581
      %v584 = vmul.f32 %v568, %v581
      %v585 = vmul.f32 %v569, %v581
      %v586 = vmul.f32 %v570, %v581
      %v587 = vmul.f32 %v571, %v581
      %v588 = vmul.f32 %v572, %v581
      %v589 = vmul.f32 %v573, %v581
      %v590 = vmul.f32 %v574, %v581
      %v591 = vadd.f32 %v534, %v583
      %v592 = vadd.f32 %v535, %v584
      %v593 = vadd.f32 %v536, %v585
      %v594 = vadd.f32 %v537, %v586
      %v595 = vadd.f32 %v538, %v587
      %v596 = vadd.f32 %v539, %v588
      %v597 = vadd.f32 %v540, %v589
      %v598 = vadd.f32 %v541, %v590
      %s599 = scalar_lea.vmem %s217, 13
      %v600 = vld [vmem:[%s599] sm:$0x1]
      %v602 = vlaneseq
      %v603 = vshrl.u32 %v602, 7
      %v604 = vsub.s32 0, %v603
      %v605 = vrot.slane %v600, %v604
      %v607 = vmul.f32 %v567, %v605
      %v608 = vmul.f32 %v568, %v605
      %v609 = vmul.f32 %v569, %v605
      %v610 = vmul.f32 %v570, %v605
      %v611 = vmul.f32 %v571, %v605
      %v612 = vmul.f32 %v572, %v605
      %v613 = vmul.f32 %v573, %v605
      %v614 = vmul.f32 %v574, %v605
      %v615 = vadd.f32 %v558, %v607
      %v616 = vadd.f32 %v559, %v608
      %v617 = vadd.f32 %v560, %v609
      %v618 = vadd.f32 %v561, %v610
      %v619 = vadd.f32 %v562, %v611
      %v620 = vadd.f32 %v563, %v612
      %v621 = vadd.f32 %v564, %v613
      %v622 = vadd.f32 %v565, %v614
      %s623 = scalar_lea.vmem %s214, 160
      %v624 = vld [vmem:[%s623] sm:$0xff]
      %v625 = vld [vmem:[%s623 + $0x10] sm:$0xff]
      %v626 = vld [vmem:[%s623 + $0x20] sm:$0xff]
      %v627 = vld [vmem:[%s623 + $0x30] sm:$0xff]
      %v628 = vld [vmem:[%s623 + $0x40] sm:$0xff]
      %v629 = vld [vmem:[%s623 + $0x50] sm:$0xff]
      %v630 = vld [vmem:[%s623 + $0x60] sm:$0xff]
      %v631 = vld [vmem:[%s623 + $0x70] sm:$0xff]
      %s632 = scalar_lea.vmem %s217, 14
      %v633 = vld [vmem:[%s632] sm:$0x1]
      %v635 = vlaneseq
      %v636 = vshrl.u32 %v635, 7
      %v637 = vsub.s32 0, %v636
      %v638 = vrot.slane %v633, %v637
      %v640 = vmul.f32 %v624, %v638
      %v641 = vmul.f32 %v625, %v638
      %v642 = vmul.f32 %v626, %v638
      %v643 = vmul.f32 %v627, %v638
      %v644 = vmul.f32 %v628, %v638
      %v645 = vmul.f32 %v629, %v638
      %v646 = vmul.f32 %v630, %v638
      %v647 = vmul.f32 %v631, %v638
      %v648 = vadd.f32 %v591, %v640
      %v649 = vadd.f32 %v592, %v641
      %v650 = vadd.f32 %v593, %v642
      %v651 = vadd.f32 %v594, %v643
      %v652 = vadd.f32 %v595, %v644
      %v653 = vadd.f32 %v596, %v645
      %v654 = vadd.f32 %v597, %v646
      %v655 = vadd.f32 %v598, %v647
      %s656 = scalar_lea.vmem %s217, 15
      %v657 = vld [vmem:[%s656] sm:$0x1]
      %v659 = vlaneseq
      %v660 = vshrl.u32 %v659, 7
      %v661 = vsub.s32 0, %v660
      %v662 = vrot.slane %v657, %v661
      %v664 = vmul.f32 %v624, %v662
      %v665 = vmul.f32 %v625, %v662
      %v666 = vmul.f32 %v626, %v662
      %v667 = vmul.f32 %v627, %v662
      %v668 = vmul.f32 %v628, %v662
      %v669 = vmul.f32 %v629, %v662
      %v670 = vmul.f32 %v630, %v662
      %v671 = vmul.f32 %v631, %v662
      %v672 = vadd.f32 %v615, %v664
      %v673 = vadd.f32 %v616, %v665
      %v674 = vadd.f32 %v617, %v666
      %v675 = vadd.f32 %v618, %v667
      %v676 = vadd.f32 %v619, %v668
      %v677 = vadd.f32 %v620, %v669
      %v678 = vadd.f32 %v621, %v670
      %v679 = vadd.f32 %v622, %v671
      %v680 = vld [vmem:[%s566 + $0x1] sm:$0xff]
      %v681 = vld [vmem:[%s566 + $0x11] sm:$0xff]
      %v682 = vld [vmem:[%s566 + $0x21] sm:$0xff]
      %v683 = vld [vmem:[%s566 + $0x31] sm:$0xff]
      %v684 = vld [vmem:[%s566 + $0x41] sm:$0xff]
      %v685 = vld [vmem:[%s566 + $0x51] sm:$0xff]
      %v686 = vld [vmem:[%s566 + $0x61] sm:$0xff]
      %v687 = vld [vmem:[%s566 + $0x71] sm:$0xff]
      %s688 = scalar_lea.vmem %s217, 16
      %v689 = vld [vmem:[%s688] sm:$0x1]
      %v691 = vlaneseq
      %v692 = vshrl.u32 %v691, 7
      %v693 = vsub.s32 0, %v692
      %v694 = vrot.slane %v689, %v693
      %v696 = vmul.f32 %v680, %v694
      %v697 = vmul.f32 %v681, %v694
      %v698 = vmul.f32 %v682, %v694
      %v699 = vmul.f32 %v683, %v694
      %v700 = vmul.f32 %v684, %v694
      %v701 = vmul.f32 %v685, %v694
      %v702 = vmul.f32 %v686, %v694
      %v703 = vmul.f32 %v687, %v694
      %v704 = vadd.f32 %v648, %v696
      %v705 = vadd.f32 %v649, %v697
      %v706 = vadd.f32 %v650, %v698
      %v707 = vadd.f32 %v651, %v699
      %v708 = vadd.f32 %v652, %v700
      %v709 = vadd.f32 %v653, %v701
      %v710 = vadd.f32 %v654, %v702
      %v711 = vadd.f32 %v655, %v703
      %s712 = scalar_lea.vmem %s217, 17
      %v713 = vld [vmem:[%s712] sm:$0x1]
      %v715 = vlaneseq
      %v716 = vshrl.u32 %v715, 7
      %v717 = vsub.s32 0, %v716
      %v718 = vrot.slane %v713, %v717
      %v720 = vmul.f32 %v680, %v718
      %v721 = vmul.f32 %v681, %v718
      %v722 = vmul.f32 %v682, %v718
      %v723 = vmul.f32 %v683, %v718
      %v724 = vmul.f32 %v684, %v718
      %v725 = vmul.f32 %v685, %v718
      %v726 = vmul.f32 %v686, %v718
      %v727 = vmul.f32 %v687, %v718
      %v728 = vadd.f32 %v672, %v720
      %v729 = vadd.f32 %v673, %v721
      %v730 = vadd.f32 %v674, %v722
      %v731 = vadd.f32 %v675, %v723
      %v732 = vadd.f32 %v676, %v724
      %v733 = vadd.f32 %v677, %v725
      %v734 = vadd.f32 %v678, %v726
      %v735 = vadd.f32 %v679, %v727
      %v736 = vld [vmem:[%s220] sm:$0x1]
      %v738 = vlaneseq
      %v739 = vshrl.u32 %v738, 7
      %v740 = vsub.s32 0, %v739
      %v741 = vrot.slane %v736, %v740
      %v743 = vadd.f32 %v704, %v741
      %v744 = vadd.f32 %v705, %v741
      %v745 = vadd.f32 %v706, %v741
      %v746 = vadd.f32 %v707, %v741
      %v747 = vadd.f32 %v708, %v741
      %v748 = vadd.f32 %v709, %v741
      %v749 = vadd.f32 %v710, %v741
      %v750 = vadd.f32 %v711, %v741
      %751 = vxpose.xlu0.b32.start [1/16] %v743, 128
      %752 = vxpose.xlu0.b32.cont [2/16] %v744, 128
      %753 = vxpose.xlu0.b32.cont [3/16] %v745, 128
      %754 = vxpose.xlu0.b32.cont [4/16] %v746, 128
      %755 = vxpose.xlu0.b32.cont [5/16] %v747, 128
      %756 = vxpose.xlu0.b32.cont [6/16] %v748, 128
      %757 = vxpose.xlu0.b32.cont [7/16] %v749, 128
      %758 = vxpose.xlu0.b32.cont [8/16] %v750, 128
      %759 = vxpose.xlu0.b32.cont [9/16] 0.0, 128
      %760 = vxpose.xlu0.b32.cont [10/16] 0.0, 128
      %761 = vxpose.xlu0.b32.cont [11/16] 0.0, 128
      %762 = vxpose.xlu0.b32.cont [12/16] 0.0, 128
      %763 = vxpose.xlu0.b32.cont [13/16] 0.0, 128
      %764 = vxpose.xlu0.b32.cont [14/16] 0.0, 128
      %765 = vxpose.xlu0.b32.cont [15/16] 0.0, 128
      %766 = vxpose.xlu0.b32.end [16/16] 0.0, 128
      %v767 = vpop.trf.xlu0
      %v768 = vpop.trf.xlu0
      %v769 = vpop.trf.xlu0
      %v770 = vpop.trf.xlu0
      %v771 = vpop.trf.xlu0
      %v772 = vpop.trf.xlu0
      %v773 = vpop.trf.xlu0
      %v774 = vpop.trf.xlu0
      %v775 = vpop.trf.xlu0
      %v776 = vpop.trf.xlu0
      %v777 = vpop.trf.xlu0
      %v778 = vpop.trf.xlu0
      %v779 = vpop.trf.xlu0
      %v780 = vpop.trf.xlu0
      %v781 = vpop.trf.xlu0
      %v782 = vpop.trf.xlu0
      %vm783 = vcmask 519168
      %784 = vst.msk [vmem:[%s227] sm:$0xf] %vm783, %v767
      %s785 = scalar_lea.vmem %s220, 1
      %v786 = vld [vmem:[%s785] sm:$0x1]
      %v788 = vlaneseq
      %v789 = vshrl.u32 %v788, 7
      %v790 = vsub.s32 0, %v789
      %v791 = vrot.slane %v786, %v790
      %v793 = vadd.f32 %v728, %v791
      %v794 = vadd.f32 %v729, %v791
      %v795 = vadd.f32 %v730, %v791
      %v796 = vadd.f32 %v731, %v791
      %v797 = vadd.f32 %v732, %v791
      %v798 = vadd.f32 %v733, %v791
      %v799 = vadd.f32 %v734, %v791
      %v800 = vadd.f32 %v735, %v791
      %801 = vxpose.xlu0.b32.start [1/16] %v793, 128
      %802 = vxpose.xlu0.b32.cont [2/16] %v794, 128
      %803 = vxpose.xlu0.b32.cont [3/16] %v795, 128
      %804 = vxpose.xlu0.b32.cont [4/16] %v796, 128
      %805 = vxpose.xlu0.b32.cont [5/16] %v797, 128
      %806 = vxpose.xlu0.b32.cont [6/16] %v798, 128
      %807 = vxpose.xlu0.b32.cont [7/16] %v799, 128
      %808 = vxpose.xlu0.b32.cont [8/16] %v800, 128
      %809 = vxpose.xlu0.b32.cont [9/16] 0.0, 128
      %810 = vxpose.xlu0.b32.cont [10/16] 0.0, 128
      %811 = vxpose.xlu0.b32.cont [11/16] 0.0, 128
      %812 = vxpose.xlu0.b32.cont [12/16] 0.0, 128
      %813 = vxpose.xlu0.b32.cont [13/16] 0.0, 128
      %814 = vxpose.xlu0.b32.cont [14/16] 0.0, 128
      %815 = vxpose.xlu0.b32.cont [15/16] 0.0, 128
      %816 = vxpose.xlu0.b32.end [16/16] 0.0, 128
      %v817 = vpop.trf.xlu0
      %v818 = vpop.trf.xlu0
      %v819 = vpop.trf.xlu0
      %v820 = vpop.trf.xlu0
      %v821 = vpop.trf.xlu0
      %v822 = vpop.trf.xlu0
      %v823 = vpop.trf.xlu0
      %v824 = vpop.trf.xlu0
      %v825 = vpop.trf.xlu0
      %v826 = vpop.trf.xlu0
      %v827 = vpop.trf.xlu0
      %v828 = vpop.trf.xlu0
      %v829 = vpop.trf.xlu0
      %v830 = vpop.trf.xlu0
      %v831 = vpop.trf.xlu0
      %v832 = vpop.trf.xlu0
      %834 = vrot.lane.b32.xlu0 %v817, 64
      %v835 = vpop.permute.xlu0 %834
      %vm837 = vcmask 1043968
      %838 = vst.msk [vmem:[%s227] sm:$0xf] %vm837, %v835
      %p839 = scmp.lt.s32.totalorder %s18, 1
      %s840 = scalar_select %p839, %s18, 1
      %p841 = scmp.lt.s32.totalorder %s19, 0
      %s842 = scalar_select %p841, %s19, 0
      %s843 = sadd.s32 %s842, %s840
      %s844 = smul.addr %s843, 4
      %s845 = scalar_lea.vmem %s3, %s844
      // Predicated region
      $region33: #{conv_head_pooling_forward.2} parent=31 // pred_check
        %p846 = pneg %p126
      $region34: #{conv_head_pooling_forward.2} parent=31 // pred_check_branch
        %848 = sbr.rel (%p846) target = $region36
      $region35: #{conv_head_pooling_forward.2} parent=31 // pred_region
        _
      $region36: #{conv_head_pooling_forward.2} parent=31 // pred_fallthru
        _
    $region32: #{conv_head_pooling_forward.2} parent=5 // pred_fallthru
      _
    %p849 = scmp.le.s32.totalorder 2, %s9
    // Predicated region
    $region37: #{conv_head_pooling_forward.2} parent=5 // pred_check
      %p850 = pneg %p849
    $region38: #{conv_head_pooling_forward.2} parent=5 // pred_check_branch
      %852 = sbr.rel (%p850) target = $region40
    $region39: #{conv_head_pooling_forward.2} parent=5 // pred_region
      %s853 = ssub.s32 %s9, 2
      // Predicated region
      $region41: #{conv_head_pooling_forward.2} parent=39 // pred_check
        %p854 = pneg %p132
      $region42: #{conv_head_pooling_forward.2} parent=39 // pred_check_branch
        %856 = sbr.rel (%p854) target = $region44
      $region43: #{conv_head_pooling_forward.2} parent=39 // pred_region
        %p857 = scmp.lt.s32.totalorder %s20, 1
        %s858 = scalar_select %p857, %s20, 1
        %p859 = scmp.lt.s32.totalorder %s21, 0
        %s860 = scalar_select %p859, %s21, 0
        %s861 = sadd.s32 %s860, %s858
        %s862 = smul.addr %s861, 4
        %s863 = scalar_lea.vmem %s3, %s862
      $region44: #{conv_head_pooling_forward.2} parent=39 // pred_fallthru
        _
    $region40: #{conv_head_pooling_forward.2} parent=5 // pred_fallthru
      _
  $region6: #{conv_head_pooling_forward.2} parent=0 // loop_footer
    %s13 = sadd.s32 1, %s9
  $region7: #{conv_head_pooling_forward.2} parent=0 // loop_footer_branch
    %8 = sbr.rel target = $region3
  $region8: #{conv_head_pooling_forward.2} parent=0 // loop_exit
    _

</llo_original>
